<compile_context>
chip_gen: v5e
topology: v5e:2x2
jax: 0.10.0
libtpu: 0.0.40
codegen_flags: <defaults>
</compile_context>

<pallas_src>
import functools

import jax
import jax.numpy as jnp
from jax.experimental import pallas as pl
from jax.experimental.pallas import tpu as pltpu

LANES = 128
MAX_TILE_R = 4096          # rows per grid step (f32: 2 MiB per input block)
PAD_LOGIT = -1.0e4         # sigmoid(PAD_LOGIT) == 0 in f32; padded BCE == 0


def _round_up(a, m):
    return ((a + m - 1) // m) * m


def _dice_bce_kernel(x_ref, t_ref, out_ref, *, rows_valid, needs_mask):
    """Per grid step: reduce one (tile_r, 128) block of logits/targets to four
    (8, 128) partial sums [p*t, p, t, bce] using only VALU adds; the cross-lane
    reduction happens once in the wrapper."""
    x = x_ref[...].astype(jnp.float32)
    t = t_ref[...].astype(jnp.float32)

    # One transcendental chain per element, sharing e = exp(-|x|):
    #   softplus(-x) = max(-x, 0) + log1p(e)      -> -log(sigmoid(x))
    #   sigmoid(x)   = where(x >= 0, 1, e)/(1+e)  (reuses e, no second exp)
    e = jnp.exp(-jnp.abs(x))
    sp = jnp.maximum(-x, 0.0) + jnp.log1p(e)
    p = jnp.where(x >= 0.0, 1.0, e) / (1.0 + e)

    # PyTorch-exact BCE: F.binary_cross_entropy clamps each log term at -100.
    log_p = -sp                # log(sigmoid(x))
    log_1mp = -(x + sp)        # log(1 - sigmoid(x))
    bce = -(t * jnp.maximum(log_p, -100.0)
            + (1.0 - t) * jnp.maximum(log_1mp, -100.0))

    pt = p * t
    t_valid = t
    if needs_mask:
        # Ragged last block: rows >= rows_valid are out-of-bounds garbage from
        # the partial DMA; select (not multiply) so NaN/Inf garbage is dropped.
        tile_r = x_ref.shape[0]
        row_ids = (pl.program_id(0) * tile_r
                   + jax.lax.broadcasted_iota(jnp.int32, x.shape, 0))
        valid = row_ids < rows_valid
        pt = jnp.where(valid, pt, 0.0)
        p = jnp.where(valid, p, 0.0)
        t_valid = jnp.where(valid, t_valid, 0.0)
        bce = jnp.where(valid, bce, 0.0)

    def block_partial(q):
        # (tile_r, 128) -> (tile_r//8, 8, 128) -> sum over leading axis:
        # layout-trivial reshape + pure VALU vreg adds (no XLU per step).
        return q.reshape(-1, 8, q.shape[-1]).sum(axis=0)

    out_ref[0, 0] = block_partial(pt)       # intersection partial
    out_ref[0, 1] = block_partial(p)        # sum(sigmoid) partial
    out_ref[0, 2] = block_partial(t_valid)  # sum(targets) partial
    out_ref[0, 3] = block_partial(bce)      # BCE-sum partial


def dice_bce_loss(inputs, targets, smooth=1.0):
    """Combined Dice + BCE loss. `inputs` are raw logits (sigmoid inside)."""
    n = inputs.size
    x = inputs.reshape(-1)                  # keep native dtype (bf16 OK)
    t = targets.reshape(-1)

    if n % LANES != 0:
        # Rare ragged-lane fallback: pad by < 128 elements so the (rows, 128)
        # view exists; PAD_LOGIT / 0 padding contributes exactly 0 to every sum.
        pad = _round_up(n, LANES) - n
        x = jnp.pad(x, (0, pad), constant_values=PAD_LOGIT)
        t = jnp.pad(t, (0, pad))

    rows = x.size // LANES                  # == cdiv(n, 128)
    x2 = x.reshape(rows, LANES)
    t2 = t.reshape(rows, LANES)

    # Largest near-even block split, rounded to the sublane multiple of 8; any
    # overhang past `rows` is masked in-kernel instead of padded in HBM.
    num_blocks = pl.cdiv(rows, MAX_TILE_R)
    tile_r = _round_up(pl.cdiv(rows, num_blocks), 8)
    grid = pl.cdiv(rows, tile_r)
    needs_mask = (grid * tile_r) != rows

    kernel = functools.partial(
        _dice_bce_kernel, rows_valid=rows, needs_mask=needs_mask)

    partials = pl.pallas_call(
        kernel,
        out_shape=jax.ShapeDtypeStruct((grid, 4, 8, LANES), jnp.float32),
        grid_spec=pltpu.PrefetchScalarGridSpec(
            num_scalar_prefetch=0,
            grid=(grid,),
            in_specs=[
                pl.BlockSpec((tile_r, LANES), lambda i: (i, 0)),
                pl.BlockSpec((tile_r, LANES), lambda i: (i, 0)),
            ],
            out_specs=pl.BlockSpec((1, 4, 8, LANES), lambda i: (i, 0, 0, 0)),
        ),
        compiler_params=pltpu.CompilerParams(
            dimension_semantics=("parallel",)),   # megacore-shardable on v7x
    )(x2, t2)

    # Final (tiny) reduction + dice/BCE combine on 4 scalars in plain JAX.
    sums = jnp.sum(partials, axis=(0, 2, 3))
    intersection, sum_p, sum_t, bce_sum = sums[0], sums[1], sums[2], sums[3]
    smooth = jnp.float32(smooth)
    dice_loss = 1.0 - (2.0 * intersection + smooth) / (sum_p + sum_t + smooth)
    return bce_sum / jnp.float32(n) + dice_loss


def _reference(inputs, targets, smooth=1.0):
    """Pure-JAX reference matching torch's DiceBCELoss (incl. the -100 clamp)."""
    p = jax.nn.sigmoid(inputs.astype(jnp.float32)).reshape(-1)
    t = targets.reshape(-1).astype(jnp.float32)
    intersection = jnp.sum(p * t)
    dice = 1.0 - (2.0 * intersection + smooth) / (jnp.sum(p) + jnp.sum(t) + smooth)
    bce = jnp.mean(-(t * jnp.maximum(jnp.log(p), -100.0)
                     + (1.0 - t) * jnp.maximum(jnp.log1p(-p), -100.0)))
    return bce + dice


if __name__ == "__main__":
    key = jax.random.PRNGKey(0)
    k1, k2 = jax.random.split(key)
    # NCHW: batch=2, channels=4, spatial=16x16
    inputs = jax.random.normal(k1, (2, 4, 16, 16), dtype=jnp.float32)
    targets = (jax.random.uniform(k2, (2, 4, 16, 16)) > 0.5).astype(jnp.float32)

    loss = dice_bce_loss(inputs, targets, smooth=1.0)
    jax.block_until_ready(loss)

    ref = _reference(inputs, targets, smooth=1.0)
    assert jnp.allclose(loss, ref, rtol=1e-5, atol=1e-5), (loss, ref)
    print("KERNEL_OK")
</pallas_src>

<mosaic_0001>
module attributes {stable_mosaic.version = 11 : i64} {
  func.func @_dice_bce_kernel(%arg0: i32, %arg1: memref<16x128xf32, #tpu.memory_space<vmem>>, %arg2: memref<16x128xf32, #tpu.memory_space<vmem>>, %arg3: memref<1x4x8x128xf32, #tpu.memory_space<vmem>>) attributes {dimension_semantics = [#tpu.dimension_semantics<parallel>], iteration_bounds = array<i64: 1>, scalar_prefetch = 0 : i64, scratch_operands = 0 : i64, tpu.core_type = #tpu.core_type<tc>, window_params = [{transform_indices = @transform_0, window_bounds = array<i64: 16, 128>}, {transform_indices = @transform_1, window_bounds = array<i64: 16, 128>}, {transform_indices = @transform_2, window_bounds = array<i64: 1, 4, 8, 128>}]} {
    %c0 = arith.constant 0 : index
    %c0_0 = arith.constant 0 : index
    %0 = vector.load %arg1[%c0, %c0_0] : memref<16x128xf32, #tpu.memory_space<vmem>>, vector<16x128xf32>
    %c0_1 = arith.constant 0 : index
    %c0_2 = arith.constant 0 : index
    %1 = vector.load %arg2[%c0_1, %c0_2] : memref<16x128xf32, #tpu.memory_space<vmem>>, vector<16x128xf32>
    %2 = math.absf %0 : vector<16x128xf32>
    %cst = arith.constant 0.000000e+00 : f32
    %3 = vector.broadcast %cst : f32 to vector<16x128xf32>
    %4 = arith.subf %3, %2 : vector<16x128xf32>
    %5 = math.exp %4 : vector<16x128xf32>
    %cst_3 = arith.constant 0.000000e+00 : f32
    %6 = vector.broadcast %cst_3 : f32 to vector<16x128xf32>
    %7 = arith.subf %6, %0 : vector<16x128xf32>
    %cst_4 = arith.constant 0.000000e+00 : f32
    %8 = vector.broadcast %cst_4 : f32 to vector<16x128xf32>
    %9 = arith.maximumf %7, %8 : vector<16x128xf32>
    %10 = math.log1p %5 : vector<16x128xf32>
    %11 = arith.addf %9, %10 : vector<16x128xf32>
    %cst_5 = arith.constant 0.000000e+00 : f32
    %12 = vector.broadcast %cst_5 : f32 to vector<16x128xf32>
    %13 = arith.cmpf oge, %0, %12 : vector<16x128xf32>
    %cst_6 = arith.constant 1.000000e+00 : f32
    %14 = vector.broadcast %cst_6 : f32 to vector<16x128xf32>
    %15 = arith.select %13, %14, %5 : vector<16x128xi1>, vector<16x128xf32>
    %cst_7 = arith.constant 1.000000e+00 : f32
    %16 = vector.broadcast %cst_7 : f32 to vector<16x128xf32>
    %17 = arith.addf %16, %5 : vector<16x128xf32>
    %18 = arith.divf %15, %17 : vector<16x128xf32>
    %cst_8 = arith.constant 0.000000e+00 : f32
    %19 = vector.broadcast %cst_8 : f32 to vector<16x128xf32>
    %20 = arith.subf %19, %11 : vector<16x128xf32>
    %21 = arith.addf %0, %11 : vector<16x128xf32>
    %cst_9 = arith.constant 0.000000e+00 : f32
    %22 = vector.broadcast %cst_9 : f32 to vector<16x128xf32>
    %23 = arith.subf %22, %21 : vector<16x128xf32>
    %cst_10 = arith.constant -1.000000e+02 : f32
    %24 = vector.broadcast %cst_10 : f32 to vector<16x128xf32>
    %25 = arith.maximumf %20, %24 : vector<16x128xf32>
    %26 = arith.mulf %1, %25 : vector<16x128xf32>
    %cst_11 = arith.constant 1.000000e+00 : f32
    %27 = vector.broadcast %cst_11 : f32 to vector<16x128xf32>
    %28 = arith.subf %27, %1 : vector<16x128xf32>
    %cst_12 = arith.constant -1.000000e+02 : f32
    %29 = vector.broadcast %cst_12 : f32 to vector<16x128xf32>
    %30 = arith.maximumf %23, %29 : vector<16x128xf32>
    %31 = arith.mulf %28, %30 : vector<16x128xf32>
    %32 = arith.addf %26, %31 : vector<16x128xf32>
    %cst_13 = arith.constant 0.000000e+00 : f32
    %33 = vector.broadcast %cst_13 : f32 to vector<16x128xf32>
    %34 = arith.subf %33, %32 : vector<16x128xf32>
    %35 = arith.mulf %18, %1 : vector<16x128xf32>
    %36 = vector.shape_cast %35 : vector<16x128xf32> to vector<2x8x128xf32>
    %cst_14 = arith.constant dense<0.000000e+00> : vector<8x128xf32>
    %37 = vector.multi_reduction <add>, %36, %cst_14 [0] : vector<2x8x128xf32> to vector<8x128xf32>
    %c0_15 = arith.constant 0 : index
    %c0_16 = arith.constant 0 : index
    %c0_17 = arith.constant 0 : index
    %c0_18 = arith.constant 0 : index
    %38 = vector.load %arg3[%c0_15, %c0_16, %c0_17, %c0_18] : memref<1x4x8x128xf32, #tpu.memory_space<vmem>>, vector<1x1x8x128xf32>
    %39 = vector.shape_cast %38 : vector<1x1x8x128xf32> to vector<8x128xf32>
    %40 = vector.shape_cast %37 : vector<8x128xf32> to vector<1x1x8x128xf32>
    tpu.vector_store %arg3[%c0_15, %c0_16, %c0_17, %c0_18], %40 {strides = array<i32>} : memref<1x4x8x128xf32, #tpu.memory_space<vmem>>, vector<1x1x8x128xf32>,
    %41 = vector.shape_cast %18 : vector<16x128xf32> to vector<2x8x128xf32>
    %cst_19 = arith.constant dense<0.000000e+00> : vector<8x128xf32>
    %42 = vector.multi_reduction <add>, %41, %cst_19 [0] : vector<2x8x128xf32> to vector<8x128xf32>
    %c0_20 = arith.constant 0 : index
    %c1 = arith.constant 1 : index
    %c0_21 = arith.constant 0 : index
    %c0_22 = arith.constant 0 : index
    %43 = vector.load %arg3[%c0_20, %c1, %c0_21, %c0_22] : memref<1x4x8x128xf32, #tpu.memory_space<vmem>>, vector<1x1x8x128xf32>
    %44 = vector.shape_cast %43 : vector<1x1x8x128xf32> to vector<8x128xf32>
    %45 = vector.shape_cast %42 : vector<8x128xf32> to vector<1x1x8x128xf32>
    tpu.vector_store %arg3[%c0_20, %c1, %c0_21, %c0_22], %45 {strides = array<i32>} : memref<1x4x8x128xf32, #tpu.memory_space<vmem>>, vector<1x1x8x128xf32>,
    %46 = vector.shape_cast %1 : vector<16x128xf32> to vector<2x8x128xf32>
    %cst_23 = arith.constant dense<0.000000e+00> : vector<8x128xf32>
    %47 = vector.multi_reduction <add>, %46, %cst_23 [0] : vector<2x8x128xf32> to vector<8x128xf32>
    %c0_24 = arith.constant 0 : index
    %c2 = arith.constant 2 : index
    %c0_25 = arith.constant 0 : index
    %c0_26 = arith.constant 0 : index
    %48 = vector.load %arg3[%c0_24, %c2, %c0_25, %c0_26] : memref<1x4x8x128xf32, #tpu.memory_space<vmem>>, vector<1x1x8x128xf32>
    %49 = vector.shape_cast %48 : vector<1x1x8x128xf32> to vector<8x128xf32>
    %50 = vector.shape_cast %47 : vector<8x128xf32> to vector<1x1x8x128xf32>
    tpu.vector_store %arg3[%c0_24, %c2, %c0_25, %c0_26], %50 {strides = array<i32>} : memref<1x4x8x128xf32, #tpu.memory_space<vmem>>, vector<1x1x8x128xf32>,
    %51 = vector.shape_cast %34 : vector<16x128xf32> to vector<2x8x128xf32>
    %cst_27 = arith.constant dense<0.000000e+00> : vector<8x128xf32>
    %52 = vector.multi_reduction <add>, %51, %cst_27 [0] : vector<2x8x128xf32> to vector<8x128xf32>
    %c0_28 = arith.constant 0 : index
    %c3 = arith.constant 3 : index
    %c0_29 = arith.constant 0 : index
    %c0_30 = arith.constant 0 : index
    %53 = vector.load %arg3[%c0_28, %c3, %c0_29, %c0_30] : memref<1x4x8x128xf32, #tpu.memory_space<vmem>>, vector<1x1x8x128xf32>
    %54 = vector.shape_cast %53 : vector<1x1x8x128xf32> to vector<8x128xf32>
    %55 = vector.shape_cast %52 : vector<8x128xf32> to vector<1x1x8x128xf32>
    tpu.vector_store %arg3[%c0_28, %c3, %c0_29, %c0_30], %55 {strides = array<i32>} : memref<1x4x8x128xf32, #tpu.memory_space<vmem>>, vector<1x1x8x128xf32>,
    return
  }
  func.func @transform_0(%arg0: i32) -> (i32, i32) {
    %c0_i32 = arith.constant 0 : i32
    %c0_i32_0 = arith.constant 0 : i32
    return %arg0, %c0_i32 : i32, i32
  }
  func.func @transform_1(%arg0: i32) -> (i32, i32) {
    %c0_i32 = arith.constant 0 : i32
    %c0_i32_0 = arith.constant 0 : i32
    return %arg0, %c0_i32 : i32, i32
  }
  func.func @transform_2(%arg0: i32) -> (i32, i32, i32, i32) {
    %c0_i32 = arith.constant 0 : i32
    %c0_i32_0 = arith.constant 0 : i32
    %c0_i32_1 = arith.constant 0 : i32
    %c0_i32_2 = arith.constant 0 : i32
    return %arg0, %c0_i32, %c0_i32_0, %c0_i32_1 : i32, i32, i32, i32
  }
}

</mosaic_0001>

<llo_original>
// kernel: tpu_custom_call.1
$region0: #{tpu_custom_call.1}
  #allocation0 [shape = 'u32[]', space=smem, size = 0x4, offset = 0x4, fixed_abs, tag = 'smem constant byte address 0x4 - core index']
  #allocation1 [shape = 'u32[72,128]{1,0:T(1,128)}', space=vmem, size = 0x9000, scoped, tag = 'internal scratch']
  %s0 = inlined_call_operand.hbm [shape: f32[16,128], index: 0, kind: input, shape index: {}]
  %s1 = inlined_call_operand.hbm [shape: f32[16,128], index: 1, kind: input, shape index: {}]
  %s2 = inlined_call_operand.hbm [shape: f32[1,4,8,128], index: 2, kind: output, shape index: {}]
  %s3 = sld [smem:[#allocation0]]
  $region26: #{tpu_custom_call.1} parent=0
    _
  %s5 = ssub.s32 1, %s3
  %s6 = scalar_select 0, %s5, %s3
  $region1: #{tpu_custom_call.1} parent=0
    #allocation2 [shape = 'u8[8192]{0}', space=vmem, size = 0x2000, scoped, tag = 'input window, operand 0, single buffered']
    #allocation3 [shape = 's32[1]{0}', space=sflag, size = 0x4, scoped, tag = 'scoped memory for tpu_custom_call.1']
    #allocation4 [shape = 's32[1]{0}', space=sflag, size = 0x4, scoped, tag = 'scoped memory for tpu_custom_call.1']
    #allocation5 [shape = 'u8[8192]{0}', space=vmem, size = 0x2000, scoped, tag = 'input window, operand 1, single buffered']
    #allocation6 [shape = 's32[1]{0}', space=sflag, size = 0x4, scoped, tag = 'scoped memory for tpu_custom_call.1']
    #allocation7 [shape = 'u8[16384]{0}', space=vmem, size = 0x4000, scoped, tag = 'output window, operand 0, single buffered']
    %7 = vsyncpa [#allocation3], 0
    %8 = vsyncpa [#allocation6], 0
    %9 = vsyncpa [#allocation4], 0
    // Predicated region
    $region2: #{tpu_custom_call.1} parent=1 // pred_check
      _
    $region3: #{tpu_custom_call.1} parent=1 // pred_check_branch
      %11 = sbr.rel (0) target = $region5
    $region4: #{tpu_custom_call.1} parent=1 // pred_region
      %13 = vsyncadd [#allocation3], 0
      %s14 = sshll.u32 %s0, 4
      %s15 = int_to_ptr.hbm [resolvable:$true] %s14
      %s16 = sshll.u32 [#allocation2], 4
      %s17 = int_to_ptr.vmem [resolvable:$true] %s16
      %22 = dma.hbm_to_vmem [thread:$0]  %s15, 256, %s17, [#allocation3], 128, 128, 8
    $region5: #{tpu_custom_call.1} parent=1 // pred_fallthru
      _
    // Predicated region
    $region6: #{tpu_custom_call.1} parent=1 // pred_check
      _
    $region7: #{tpu_custom_call.1} parent=1 // pred_check_branch
      %24 = sbr.rel (0) target = $region9
    $region8: #{tpu_custom_call.1} parent=1 // pred_region
      %26 = vsyncadd [#allocation6], 0
      %s27 = sshll.u32 %s1, 4
      %s28 = int_to_ptr.hbm [resolvable:$true] %s27
      %s29 = sshll.u32 [#allocation5], 4
      %s30 = int_to_ptr.vmem [resolvable:$true] %s29
      %35 = dma.hbm_to_vmem [thread:$0]  %s28, 256, %s30, [#allocation6], 128, 128, 8
    $region9: #{tpu_custom_call.1} parent=1 // pred_fallthru
      _
    // Predicated region
    $region10: #{tpu_custom_call.1} parent=1 // pred_check
      _
    $region11: #{tpu_custom_call.1} parent=1 // pred_check_branch
      %37 = sbr.rel (0) target = $region13
    $region12: #{tpu_custom_call.1} parent=1 // pred_region
      %39 = dma.done [#allocation3], 256
    $region13: #{tpu_custom_call.1} parent=1 // pred_fallthru
      _
    // Predicated region
    $region14: #{tpu_custom_call.1} parent=1 // pred_check
      _
    $region15: #{tpu_custom_call.1} parent=1 // pred_check_branch
      %41 = sbr.rel (0) target = $region17
    $region16: #{tpu_custom_call.1} parent=1 // pred_region
      %43 = dma.done [#allocation6], 256
    $region17: #{tpu_custom_call.1} parent=1 // pred_fallthru
      _
    %v44 = vld [vmem:[#allocation2] sm:$0xff]
    %v45 = vld [vmem:[#allocation2 + $0x8] sm:$0xff]
    %v46 = vld [vmem:[#allocation5] sm:$0xff]
    %v47 = vld [vmem:[#allocation5 + $0x8] sm:$0xff]
    %v48 = vand.u32 2147483647, %v44
    %v49 = vand.u32 2147483647, %v45
    %v50 = vsub.f32 0.0, %v48
    %v51 = vsub.f32 0.0, %v49
    %v52 = vmul.f32 %v50, 1.442695
    %v53 = vpow.pop %v52
    %v54 = vmul.f32 %v51, 1.442695
    %v55 = vpow.pop %v54
    %v56 = vsub.f32 0.0, %v44
    %v57 = vsub.f32 0.0, %v45
    %v58 = vmax.f32 %v56, 0.0
    %v59 = vmax.f32 %v57, 0.0
    %v60 = vadd.f32 %v53, 1.0
    %v61 = vlog2.pop %v60
    %v62 = vmul.f32 %v61, 0.6931472
    %v63 = vmul.f32 -0.5, %v53
    %v64 = vadd.f32 %v63, 1.0
    %v65 = vmul.f32 %v64, %v53
    %v66 = vand.u32 2147483647, %v53
    %vm67 = vcmp.lt.f32.partialorder %v66, 0.0004427343
    %v68 = vsel %vm67, %v65, %v62
    %v69 = vadd.f32 %v55, 1.0
    %v70 = vlog2.pop %v69
    %v71 = vmul.f32 %v70, 0.6931472
    %v72 = vmul.f32 -0.5, %v55
    %v73 = vadd.f32 %v72, 1.0
    %v74 = vmul.f32 %v73, %v55
    %v75 = vand.u32 2147483647, %v55
    %vm76 = vcmp.lt.f32.partialorder %v75, 0.0004427343
    %v77 = vsel %vm76, %v74, %v71
    %v78 = vadd.f32 %v58, %v68
    %v79 = vadd.f32 %v59, %v77
    %vm80 = vcmp.ge.f32.partialorder %v44, 0.0
    %vm81 = vcmp.ge.f32.partialorder %v45, 0.0
    %v82 = vsel %vm80, 1.0, %v53
    %v83 = vsel %vm81, 1.0, %v55
    %v84 = vadd.f32 %v53, 1.0
    %v85 = vadd.f32 %v55, 1.0
    %v86 = vrcp.pop %v84
    %v87 = vmul.f32 %v84, %v86
    %v88 = vsub.f32 1.0, %v87
    %v89 = vmul.f32 %v86, %v88
    %v90 = vadd.f32 %v86, %v89
    %vm91 = vweird.f32 %v84
    %vm92 = vweird.f32 %v86
    %vm93 = vmor %vm91, %vm92
    %v94 = vsel %vm93, %v86, %v90
    %v95 = vand.u32 2147483647, %v84
    %vm96 = vcmp.eq.f32.partialorder %v95, 8.507059e+37
    %v97 = vand.u32 %v84, 2147483648
    %v98 = vor.u32 1.1754944e-38, %v97
    %v99 = vsel %vm96, %v98, %v94
    %v100 = vmul.f32 %v82, %v99
    %v101 = vrcp.pop %v85
    %v102 = vmul.f32 %v85, %v101
    %v103 = vsub.f32 1.0, %v102
    %v104 = vmul.f32 %v101, %v103
    %v105 = vadd.f32 %v101, %v104
    %vm106 = vweird.f32 %v85
    %vm107 = vweird.f32 %v101
    %vm108 = vmor %vm106, %vm107
    %v109 = vsel %vm108, %v101, %v105
    %v110 = vand.u32 2147483647, %v85
    %vm111 = vcmp.eq.f32.partialorder %v110, 8.507059e+37
    %v112 = vand.u32 %v85, 2147483648
    %v113 = vor.u32 1.1754944e-38, %v112
    %v114 = vsel %vm111, %v113, %v109
    %v115 = vmul.f32 %v83, %v114
    %v116 = vsub.f32 0.0, %v78
    %v117 = vsub.f32 0.0, %v79
    %v118 = vadd.f32 %v44, %v78
    %v119 = vadd.f32 %v45, %v79
    %v120 = vsub.f32 0.0, %v118
    %v121 = vsub.f32 0.0, %v119
    %v122 = vmax.f32 %v116, -100.0
    %v123 = vmax.f32 %v117, -100.0
    %v124 = vmul.f32 %v46, %v122
    %v125 = vmul.f32 %v47, %v123
    %v126 = vsub.f32 1.0, %v46
    %v127 = vsub.f32 1.0, %v47
    %v128 = vmax.f32 %v120, -100.0
    %v129 = vmax.f32 %v121, -100.0
    %v130 = vmul.f32 %v126, %v128
    %v131 = vmul.f32 %v127, %v129
    %v132 = vadd.f32 %v124, %v130
    %v133 = vadd.f32 %v125, %v131
    %v134 = vsub.f32 0.0, %v132
    %v135 = vsub.f32 0.0, %v133
    %v136 = vmul.f32 %v100, %v46
    %v137 = vmul.f32 %v115, %v47
    %v138 = vadd.f32 %v136, %v137
    %139 = vst [vmem:[#allocation7] sm:$0xff] %v138
    %v140 = vadd.f32 %v100, %v115
    %s141 = scalar_lea.vmem [#allocation7], 8
    %142 = vst [vmem:[%s141] sm:$0xff] %v140
    %v143 = vadd.f32 %v46, %v47
    %s144 = scalar_lea.vmem [#allocation7], 16
    %145 = vst [vmem:[%s144] sm:$0xff] %v143
    %v146 = vadd.f32 %v134, %v135
    %s147 = scalar_lea.vmem [#allocation7], 24
    %148 = vst [vmem:[%s147] sm:$0xff] %v146
    // Predicated region
    $region18: #{tpu_custom_call.1} parent=1 // pred_check
      _
    $region19: #{tpu_custom_call.1} parent=1 // pred_check_branch
      %150 = sbr.rel (0) target = $region21
    $region20: #{tpu_custom_call.1} parent=1 // pred_region
      %152 = vsyncadd [#allocation4], 0
      %s153 = sshll.u32 [#allocation7], 4
      %s154 = int_to_ptr.vmem [resolvable:$true] %s153
      %s155 = sshll.u32 %s2, 4
      %s156 = int_to_ptr.hbm [resolvable:$true] %s155
      %161 = dma.vmem_to_hbm [thread:$0]  %s154, 512, %s156, [#allocation4], 128, 128, 8
    $region21: #{tpu_custom_call.1} parent=1 // pred_fallthru
      _
    // Predicated region
    $region22: #{tpu_custom_call.1} parent=1 // pred_check
      _
    $region23: #{tpu_custom_call.1} parent=1 // pred_check_branch
      %163 = sbr.rel (0) target = $region25
    $region24: #{tpu_custom_call.1} parent=1 // pred_region
      %165 = dma.done [#allocation4], 512
    $region25: #{tpu_custom_call.1} parent=1 // pred_fallthru
      _
    %166 = vsyncpa [#allocation3], 1
    %167 = vsyncpa [#allocation6], 1
    %168 = vsyncpa [#allocation4], 1

</llo_original>
